<compile_context>
chip_gen: v6e
topology: v6e:2x2x1
jax: 0.10.0
libtpu: 0.0.40
codegen_flags: <defaults>
</compile_context>

<pallas_src>
import functools

import jax
import jax.numpy as jnp
from jax.experimental import pallas as pl
from jax.experimental.pallas import tpu as pltpu


def _round_up(x, m):
    return (x + m - 1) // m * m


def _attention_kernel(emb_ref, w_ref, out_ref, ctx_ref, *, inv_n):
    """Two-pass attention pooling.

    Grid = (2, num_tiles_n); axis 0 is the pass, axis 1 streams row tiles.

      pass 0: accumulate column-sum of embedding into ctx_ref; on the last
              tile fold the mean through W and apply tanh (ctx_ref := tg).
      pass 1: per-tile scores = sigmoid(<emb_row, tg>), accumulate
              sum_rows(emb * scores) into the (1, F) lane-dense output.

    emb_ref: (tile_n, F) VMEM     w_ref: (F, F) VMEM
    out_ref: (1, F)     VMEM      ctx_ref: (1, F) f32 VMEM scratch
    """
    p = pl.program_id(0)
    i = pl.program_id(1)
    last_i = pl.num_programs(1) - 1

    # ---------------- pass 0: column sum -> global context -> tanh ----------
    @pl.when(p == 0)
    def _pass0():
        @pl.when(i == 0)
        def _init():
            ctx_ref[...] = jnp.zeros_like(ctx_ref)

        emb = emb_ref[...].astype(jnp.float32)                       # (tile_n, F)
        ctx_ref[...] += jnp.sum(emb, axis=0, keepdims=True)          # sublane reduce

        @pl.when(i == last_i)
        def _finalize():
            gc = ctx_ref[...] * inv_n                                # (1, F) mean
            gc = jnp.dot(gc, w_ref[...].astype(jnp.float32),
                         preferred_element_type=jnp.float32)         # single FxF matmul
            ctx_ref[...] = jnp.tanh(gc)                              # EUP

    # ---------------- pass 1: scores + representation accumulation ----------
    @pl.when(p == 1)
    def _pass1():
        @pl.when(i == 0)
        def _init():
            out_ref[...] = jnp.zeros_like(out_ref)

        emb = emb_ref[...].astype(jnp.float32)                       # (tile_n, F)
        tg = ctx_ref[...]                                            # (1, F)
        # logits = emb @ tg^T without the width-1 matmul: VPU mul + lane reduce.
        logits = jnp.sum(emb * tg, axis=-1, keepdims=True)           # (tile_n, 1)
        scores = jax.nn.sigmoid(logits)                              # (tile_n, 1)
        # representation^T = sum_rows(emb * scores): VPU mul + sublane reduce,
        # accumulated directly into the lane-dense (1, F) output block.
        out_ref[...] += jnp.sum(emb * scores, axis=0, keepdims=True)


def attention_module(embedding, weight_matrix, *, tile_n=1024):
    """embedding: (N, F) f32, weight_matrix: (F, F) f32 -> (F, 1) f32."""
    n, f = embedding.shape
    assert weight_matrix.shape == (f, f)

    # Row tile: multiple of 8 (sublane), capped so double-buffered tiles stay
    # tiny relative to scoped VMEM on every generation (1024*F*4B*2 << 16 MiB).
    tile_n = min(tile_n, max(8, _round_up(n, 8)))
    tile_n = _round_up(tile_n, 8)
    n_pad = _round_up(n, tile_n)
    if n_pad != n:
        # Zero-padded rows are exact no-ops (see header comment).
        embedding = jnp.pad(embedding, ((0, n_pad - n), (0, 0)))
    num_tiles = n_pad // tile_n

    kernel = functools.partial(_attention_kernel, inv_n=1.0 / n)

    rep_row = pl.pallas_call(
        kernel,
        out_shape=jax.ShapeDtypeStruct((1, f), jnp.float32),
        grid_spec=pltpu.PrefetchScalarGridSpec(
            num_scalar_prefetch=0,
            grid=(2, num_tiles),                      # (pass, row-tile)
            in_specs=[
                pl.BlockSpec((tile_n, f), lambda p, i: (i, 0)),
                pl.BlockSpec((f, f), lambda p, i: (0, 0)),
            ],
            out_specs=pl.BlockSpec((1, f), lambda p, i: (0, 0)),
            scratch_shapes=[pltpu.VMEM((1, f), jnp.float32)],
        ),
        compiler_params=pltpu.CompilerParams(
            # Both axes carry accumulator / cross-pass dependencies.
            dimension_semantics=("arbitrary", "arbitrary"),
        ),
    )(embedding, weight_matrix)

    # Lane-dense (1, F) inside the kernel; present (F, 1) as the module does.
    return rep_row.reshape(f, 1)


def _reference(embedding, weight_matrix):
    """Pure-JAX reference mirroring the PyTorch forward exactly."""
    global_context = jnp.mean(embedding @ weight_matrix, axis=0)      # (F,)
    transformed_global = jnp.tanh(global_context)                     # (F,)
    sigmoid_scores = jax.nn.sigmoid(
        embedding @ transformed_global.reshape(-1, 1))                # (N, 1)
    representation = embedding.T @ sigmoid_scores                     # (F, 1)
    return representation


if __name__ == "__main__":
    key = jax.random.PRNGKey(0)
    k_emb, k_w, k_emb2 = jax.random.split(key, 3)

    # Small shapes consistent with the module: N graph nodes, F = filters_3.
    N, F = 8, 32
    embedding = jax.random.normal(k_emb, (N, F), dtype=jnp.float32)

    # Xavier-uniform init of weight_matrix (F, F): U(-a, a), a = sqrt(6 / (F + F)).
    bound = (6.0 / (F + F)) ** 0.5
    weight_matrix = jax.random.uniform(
        k_w, (F, F), dtype=jnp.float32, minval=-bound, maxval=bound
    )

    out = attention_module(embedding, weight_matrix)
    out = jax.block_until_ready(out)
    ref = _reference(embedding, weight_matrix)
    assert out.shape == (F, 1)
    assert jnp.allclose(out, ref, atol=1e-4, rtol=1e-4), (
        f"mismatch: max abs diff {jnp.max(jnp.abs(out - ref))}"
    )

    # Second check: exercise multi-tile streaming + ragged-N padding path.
    N2 = 200
    embedding2 = jax.random.normal(k_emb2, (N2, F), dtype=jnp.float32)
    out2 = attention_module(embedding2, weight_matrix, tile_n=64)
    out2 = jax.block_until_ready(out2)
    ref2 = _reference(embedding2, weight_matrix)
    assert out2.shape == (F, 1)
    assert jnp.allclose(out2, ref2, atol=1e-4, rtol=1e-4), (
        f"tiled mismatch: max abs diff {jnp.max(jnp.abs(out2 - ref2))}"
    )

    print("KERNEL_OK")
</pallas_src>

<mosaic_0001>
module attributes {stable_mosaic.version = 11 : i64} {
  func.func @_attention_kernel(%arg0: i32, %arg1: i32, %arg2: memref<8x32xf32, #tpu.memory_space<vmem>>, %arg3: memref<32x32xf32, #tpu.memory_space<vmem>>, %arg4: memref<1x32xf32, #tpu.memory_space<vmem>>, %arg5: memref<1x32xf32, #tpu.memory_space<vmem>>) attributes {dimension_semantics = [#tpu.dimension_semantics<arbitrary>, #tpu.dimension_semantics<arbitrary>], iteration_bounds = array<i64: 2, 1>, scalar_prefetch = 0 : i64, scratch_operands = 1 : i64, tpu.core_type = #tpu.core_type<tc>, window_params = [{transform_indices = @transform_0, window_bounds = array<i64: 8, 32>}, {pipeline_mode = #tpu.pipeline_mode<synchronous>, transform_indices = @transform_1, window_bounds = array<i64: 32, 32>}, {pipeline_mode = #tpu.pipeline_mode<synchronous>, transform_indices = @transform_2, window_bounds = array<i64: 1, 32>}]} {
    %c0_i32 = arith.constant 0 : i32
    %0 = arith.cmpi eq, %arg0, %c0_i32 : i32
    %1 = arith.extui %0 : i1 to i32
    %c0_i32_0 = arith.constant 0 : i32
    %2 = arith.cmpi ne, %1, %c0_i32_0 : i32
    scf.if %2 {
      %c0_i32_2 = arith.constant 0 : i32
      %6 = arith.cmpi eq, %arg1, %c0_i32_2 : i32
      %7 = arith.extui %6 : i1 to i32
      %c0_i32_3 = arith.constant 0 : i32
      %8 = arith.cmpi ne, %7, %c0_i32_3 : i32
      scf.if %8 {
        %cst_11 = arith.constant 0.000000e+00 : f32
        %18 = vector.broadcast %cst_11 : f32 to vector<1x32xf32>
        %c0_12 = arith.constant 0 : index
        %c0_13 = arith.constant 0 : index
        %19 = vector.load %arg5[%c0_12, %c0_13] : memref<1x32xf32, #tpu.memory_space<vmem>>, vector<1x32xf32>
        tpu.vector_store %arg5[%c0_12, %c0_13], %18 {strides = array<i32>} : memref<1x32xf32, #tpu.memory_space<vmem>>, vector<1x32xf32>,
      } else {
      }
      %c0 = arith.constant 0 : index
      %c0_4 = arith.constant 0 : index
      %9 = vector.load %arg2[%c0, %c0_4] : memref<8x32xf32, #tpu.memory_space<vmem>>, vector<8x32xf32>
      %c0_5 = arith.constant 0 : index
      %c0_6 = arith.constant 0 : index
      %10 = vector.load %arg5[%c0_5, %c0_6] : memref<1x32xf32, #tpu.memory_space<vmem>>, vector<1x32xf32>
      %cst = arith.constant dense<0.000000e+00> : vector<32xf32>
      %11 = vector.multi_reduction <add>, %9, %cst [0] : vector<8x32xf32> to vector<32xf32>
      %12 = vector.shape_cast %11 : vector<32xf32> to vector<1x32xf32>
      %13 = arith.addf %10, %12 : vector<1x32xf32>
      %c0_7 = arith.constant 0 : index
      %c0_8 = arith.constant 0 : index
      %14 = vector.load %arg5[%c0_7, %c0_8] : memref<1x32xf32, #tpu.memory_space<vmem>>, vector<1x32xf32>
      tpu.vector_store %arg5[%c0_7, %c0_8], %13 {strides = array<i32>} : memref<1x32xf32, #tpu.memory_space<vmem>>, vector<1x32xf32>,
      %c0_i32_9 = arith.constant 0 : i32
      %15 = arith.cmpi eq, %arg1, %c0_i32_9 : i32
      %16 = arith.extui %15 : i1 to i32
      %c0_i32_10 = arith.constant 0 : i32
      %17 = arith.cmpi ne, %16, %c0_i32_10 : i32
      scf.if %17 {
        %c0_11 = arith.constant 0 : index
        %c0_12 = arith.constant 0 : index
        %18 = vector.load %arg5[%c0_11, %c0_12] : memref<1x32xf32, #tpu.memory_space<vmem>>, vector<1x32xf32>
        %cst_13 = arith.constant 1.250000e-01 : f32
        %19 = vector.broadcast %cst_13 : f32 to vector<1x32xf32>
        %20 = arith.mulf %18, %19 : vector<1x32xf32>
        %c0_14 = arith.constant 0 : index
        %c0_15 = arith.constant 0 : index
        %21 = vector.load %arg3[%c0_14, %c0_15] : memref<32x32xf32, #tpu.memory_space<vmem>>, vector<32x32xf32>
        %cst_16 = arith.constant dense<0.000000e+00> : vector<1x32xf32>
        %22 = tpu.matmul %20, %21, %cst_16 {dimension_numbers = #tpu.dot_dimension_numbers<[1], [0], [0], [1], [0, 0, 1, 1], [], []>} : vector<1x32xf32>, vector<32x32xf32>, vector<1x32xf32> -> vector<1x32xf32>
        %23 = math.tanh %22 : vector<1x32xf32>
        %c0_17 = arith.constant 0 : index
        %c0_18 = arith.constant 0 : index
        %24 = vector.load %arg5[%c0_17, %c0_18] : memref<1x32xf32, #tpu.memory_space<vmem>>, vector<1x32xf32>
        tpu.vector_store %arg5[%c0_17, %c0_18], %23 {strides = array<i32>} : memref<1x32xf32, #tpu.memory_space<vmem>>, vector<1x32xf32>,
      } else {
      }
    } else {
    }
    %c1_i32 = arith.constant 1 : i32
    %3 = arith.cmpi eq, %arg0, %c1_i32 : i32
    %4 = arith.extui %3 : i1 to i32
    %c0_i32_1 = arith.constant 0 : i32
    %5 = arith.cmpi ne, %4, %c0_i32_1 : i32
    scf.if %5 {
      %c0_i32_2 = arith.constant 0 : i32
      %6 = arith.cmpi eq, %arg1, %c0_i32_2 : i32
      %7 = arith.extui %6 : i1 to i32
      %c0_i32_3 = arith.constant 0 : i32
      %8 = arith.cmpi ne, %7, %c0_i32_3 : i32
      scf.if %8 {
        %cst_13 = arith.constant 0.000000e+00 : f32
        %27 = vector.broadcast %cst_13 : f32 to vector<1x32xf32>
        %c0_14 = arith.constant 0 : index
        %c0_15 = arith.constant 0 : index
        %28 = vector.load %arg4[%c0_14, %c0_15] : memref<1x32xf32, #tpu.memory_space<vmem>>, vector<1x32xf32>
        tpu.vector_store %arg4[%c0_14, %c0_15], %27 {strides = array<i32>} : memref<1x32xf32, #tpu.memory_space<vmem>>, vector<1x32xf32>,
      } else {
      }
      %c0 = arith.constant 0 : index
      %c0_4 = arith.constant 0 : index
      %9 = vector.load %arg2[%c0, %c0_4] : memref<8x32xf32, #tpu.memory_space<vmem>>, vector<8x32xf32>
      %c0_5 = arith.constant 0 : index
      %c0_6 = arith.constant 0 : index
      %10 = vector.load %arg5[%c0_5, %c0_6] : memref<1x32xf32, #tpu.memory_space<vmem>>, vector<1x32xf32>
      %11 = vector.broadcast %10 : vector<1x32xf32> to vector<8x32xf32>
      %12 = arith.mulf %9, %11 : vector<8x32xf32>
      %cst = arith.constant dense<0.000000e+00> : vector<8xf32>
      %13 = vector.multi_reduction <add>, %12, %cst [1] : vector<8x32xf32> to vector<8xf32>
      %14 = vector.shape_cast %13 : vector<8xf32> to vector<8x1xf32>
      %15 = arith.negf %14 : vector<8x1xf32>
      %16 = math.exp %15 : vector<8x1xf32>
      %cst_7 = arith.constant 1.000000e+00 : f32
      %17 = vector.broadcast %cst_7 : f32 to vector<8x1xf32>
      %18 = arith.addf %17, %16 : vector<8x1xf32>
      %19 = arith.divf %17, %18 : vector<8x1xf32>
      %c0_8 = arith.constant 0 : index
      %c0_9 = arith.constant 0 : index
      %20 = vector.load %arg4[%c0_8, %c0_9] : memref<1x32xf32, #tpu.memory_space<vmem>>, vector<1x32xf32>
      %21 = vector.broadcast %19 : vector<8x1xf32> to vector<8x32xf32>
      %22 = arith.mulf %9, %21 : vector<8x32xf32>
      %cst_10 = arith.constant dense<0.000000e+00> : vector<32xf32>
      %23 = vector.multi_reduction <add>, %22, %cst_10 [0] : vector<8x32xf32> to vector<32xf32>
      %24 = vector.shape_cast %23 : vector<32xf32> to vector<1x32xf32>
      %25 = arith.addf %20, %24 : vector<1x32xf32>
      %c0_11 = arith.constant 0 : index
      %c0_12 = arith.constant 0 : index
      %26 = vector.load %arg4[%c0_11, %c0_12] : memref<1x32xf32, #tpu.memory_space<vmem>>, vector<1x32xf32>
      tpu.vector_store %arg4[%c0_11, %c0_12], %25 {strides = array<i32>} : memref<1x32xf32, #tpu.memory_space<vmem>>, vector<1x32xf32>,
    } else {
    }
    return
  }
  func.func @transform_0(%arg0: i32, %arg1: i32) -> (i32, i32) {
    %c0_i32 = arith.constant 0 : i32
    %c0_i32_0 = arith.constant 0 : i32
    return %arg1, %c0_i32 : i32, i32
  }
  func.func @transform_1(%arg0: i32, %arg1: i32) -> (i32, i32) {
    %c0_i32 = arith.constant 0 : i32
    %c0_i32_0 = arith.constant 0 : i32
    %c0_i32_1 = arith.constant 0 : i32
    return %c0_i32, %c0_i32_0 : i32, i32
  }
  func.func @transform_2(%arg0: i32, %arg1: i32) -> (i32, i32) {
    %c0_i32 = arith.constant 0 : i32
    %c0_i32_0 = arith.constant 0 : i32
    %c0_i32_1 = arith.constant 0 : i32
    return %c0_i32, %c0_i32_0 : i32, i32
  }
}

</mosaic_0001>

<llo_original>
// kernel: tpu_custom_call.1
$region0: #{tpu_custom_call.1}
  #allocation0 [shape = 'u32[]', space=smem, size = 0x4, offset = 0x4, fixed_abs, tag = 'smem constant byte address 0x4 - core index']
  #allocation1 [shape = 'u32[144,128]{1,0:T(1,128)}', space=vmem, size = 0x12000, scoped, tag = 'internal scratch']
  #allocation2 [shape = 'f32[1,32]{1,0:T(1,128)}', space=vmem, size = 0x200, scoped, tag = 'scratch operand']
  %s0 = inlined_call_operand.hbm [shape: f32[8,32], index: 0, kind: input, shape index: {}]
  %s1 = inlined_call_operand.hbm [shape: f32[32,32], index: 1, kind: input, shape index: {}]
  %s2 = inlined_call_operand.hbm [shape: f32[1,32], index: 2, kind: output, shape index: {}]
  %s3 = sld [smem:[#allocation0]]
  $region69: #{tpu_custom_call.1} parent=0
    _
  %s5 = ssub.s32 1, %s3
  %s6 = scalar_select 0, %s5, %s3
  $region1: #{tpu_custom_call.1} parent=0
    #allocation3 [shape = 'u8[4096]{0}', space=vmem, size = 0x1000, scoped, tag = 'input window, operand 0, single buffered']
    #allocation4 [shape = 's32[2]{0}', space=sflag, size = 0x8, scoped, tag = 'scoped memory for tpu_custom_call.1']
    #allocation5 [shape = 's32[2]{0}', space=sflag, size = 0x8, scoped, tag = 'scoped memory for tpu_custom_call.1']
    #allocation6 [shape = 'u8[16384]{0}', space=vmem, size = 0x4000, scoped, tag = 'input window, operand 1, single buffered']
    #allocation7 [shape = 's32[1]{0}', space=sflag, size = 0x4, scoped, tag = 'scoped memory for tpu_custom_call.1']
    #allocation8 [shape = 'u8[512]{0}', space=vmem, size = 0x400, scoped, tag = 'output window, operand 0, single buffered']
    %7 = vsyncpa [#allocation4], 0
    %8 = vsyncpa [#allocation7], 0
    %9 = vsyncpa [#allocation5], 0
    loop: start=0, step=1, limit=4
    $region2: #{tpu_custom_call.1} parent=1 // loop_pre_header
      _
    $region3: #{tpu_custom_call.1} parent=1 // loop_header
      %s11 = sphi 0, %s15
      %p12 = scmp.ge.s32.totalorder %s11, 4
      %s18 = sphi 0, %s30
      %s19 = sphi 0, %s26
      %s20 = sphi 0, %s18
      %s21 = sphi 0, %s19
      %s22 = sphi 0, %s20
      %s23 = sphi 0, %s21
      %s33 = sphi 0, %s35
      %s36 = sphi 0, %s33
      %s37 = sphi 0, %s36
      %s53 = sphi 0, %s37
      %s57 = sphi 0, %s57
      %s59 = sphi 0, %s57
      %s60 = sphi 0, %s59
      %s74 = sphi 0, %s60
      %s78 = sphi 0, %s78
      %s80 = sphi 0, %s78
      %s81 = sphi 0, %s80
      %s95 = sphi 0, %s81
    $region4: #{tpu_custom_call.1} parent=1 // loop_header_branch
      %14 = sbr.rel (%p12) target = $region8
    $region5: #{tpu_custom_call.1} parent=1 // loop_body
      %s16 = ssub.s32 %s11, 1
      %s17 = ssub.s32 %s11, 2
      %s24 = sadd.s32 1, %s19
      %p25 = scmp.ge.s32.totalorder %s24, 1
      %s26 = scalar_select %p25, 0, %s24
      %s27 = sadd.s32 1, %s18
      %s28 = scalar_select %p25, %s27, %s18
      %p29 = scmp.ge.s32.totalorder %s28, 2
      %s30 = scalar_select %p29, 0, %s28
      %s31 = ssub.s32 %s19, %s26
      %p32 = scmp.eq.s32.totalorder %s31, 0
      %s34 = sadd.s32 %s33, 1
      %s35 = scalar_select %p32, %s33, %s34
      %p38 = pneg %p32
      %p39 = scmp.eq.s32.totalorder %s11, 1
      %p40 = por %p38, %p39
      %p41 = scmp.ne.s32.totalorder %s33, %s36
      %p42 = scmp.eq.s32.totalorder %s11, 0
      %p43 = por %p41, %p42
      %p44 = scmp.ne.s32.totalorder %s33, %s36
      %p45 = scmp.eq.s32.totalorder %s16, 1
      %p46 = por %p44, %p45
      %p47 = scmp.ne.s32.totalorder %s36, %s37
      %p48 = scmp.eq.s32.totalorder %s16, 0
      %p49 = por %p47, %p48
      %p50 = scmp.ne.s32.totalorder %s36, %s37
      %p51 = scmp.eq.s32.totalorder %s17, 1
      %p52 = por %p50, %p51
      %p54 = scmp.ne.s32.totalorder %s37, %s53
      %p55 = scmp.eq.s32.totalorder %s17, 0
      %p56 = por %p54, %p55
      %s58 = sadd.s32 %s57, 1
      %p61 = scmp.eq.s32.totalorder %s11, 1
      %p62 = scmp.ne.s32.totalorder %s57, %s59
      %p63 = scmp.eq.s32.totalorder %s11, 0
      %p64 = por %p62, %p63
      %p65 = scmp.ne.s32.totalorder %s57, %s59
      %p66 = scmp.eq.s32.totalorder %s16, 1
      %p67 = por %p65, %p66
      %p68 = scmp.ne.s32.totalorder %s59, %s60
      %p69 = scmp.eq.s32.totalorder %s16, 0
      %p70 = por %p68, %p69
      %p71 = scmp.ne.s32.totalorder %s59, %s60
      %p72 = scmp.eq.s32.totalorder %s17, 1
      %p73 = por %p71, %p72
      %p75 = scmp.ne.s32.totalorder %s60, %s74
      %p76 = scmp.eq.s32.totalorder %s17, 0
      %p77 = por %p75, %p76
      %s79 = sadd.s32 %s78, 1
      %p82 = scmp.eq.s32.totalorder %s11, 1
      %p83 = scmp.ne.s32.totalorder %s78, %s80
      %p84 = scmp.eq.s32.totalorder %s11, 0
      %p85 = por %p83, %p84
      %p86 = scmp.ne.s32.totalorder %s78, %s80
      %p87 = scmp.eq.s32.totalorder %s16, 1
      %p88 = por %p86, %p87
      %p89 = scmp.ne.s32.totalorder %s80, %s81
      %p90 = scmp.eq.s32.totalorder %s16, 0
      %p91 = por %p89, %p90
      %p92 = scmp.ne.s32.totalorder %s80, %s81
      %p93 = scmp.eq.s32.totalorder %s17, 1
      %p94 = por %p92, %p93
      %p96 = scmp.ne.s32.totalorder %s81, %s95
      %p97 = scmp.eq.s32.totalorder %s17, 0
      %p98 = por %p96, %p97
      %p99 = scmp.le.s32.totalorder 1, %s11
      %p100 = scmp.lt.s32.totalorder %s11, 3
      %p101 = pnand %p99, %p100
      %p102 = pneg %p101
      // Predicated region
      $region9: #{tpu_custom_call.1} parent=5 // pred_check
        _
      $region10: #{tpu_custom_call.1} parent=5 // pred_check_branch
        %104 = sbr.rel (%p101) target = $region12
      $region11: #{tpu_custom_call.1} parent=5 // pred_region
        %s105 = ssub.s32 %s11, 1
        // Predicated region
        $region13: #{tpu_custom_call.1} parent=11 // pred_check
          %p106 = pneg %p49
        $region14: #{tpu_custom_call.1} parent=11 // pred_check_branch
          %108 = sbr.rel (%p106) target = $region16
        $region15: #{tpu_custom_call.1} parent=11 // pred_region
          %s110 = ssub.s32 128, 128
          %111 = vsyncadd [#allocation4], %s110
          %s112 = smul.addr %s21, 128
          %s113 = scalar_lea.hbm %s0, %s112
          %s115 = sshll.u32 [#allocation3], 4
          %s116 = int_to_ptr.vmem [resolvable:$true] %s115
          %118 = dma.hbm_to_vmem [thread:$0]  %s113, 128, %s116, [#allocation4]
        $region16: #{tpu_custom_call.1} parent=11 // pred_fallthru
          _
        // Predicated region
        $region17: #{tpu_custom_call.1} parent=11 // pred_check
          %p119 = pneg %p70
        $region18: #{tpu_custom_call.1} parent=11 // pred_check_branch
          %121 = sbr.rel (%p119) target = $region20
        $region19: #{tpu_custom_call.1} parent=11 // pred_region
          %s123 = ssub.s32 512, 512
          %124 = vsyncadd [#allocation7], %s123
          %s125 = sshll.u32 [#allocation6], 4
          %s126 = int_to_ptr.vmem [resolvable:$true] %s125
          %131 = dma.hbm_to_vmem [thread:$0]  %s1, 512, %s126, [#allocation7], 128, 128, 8
        $region20: #{tpu_custom_call.1} parent=11 // pred_fallthru
          _
      $region12: #{tpu_custom_call.1} parent=5 // pred_fallthru
        _
      %p132 = scmp.lt.s32.totalorder %s11, 2
      // Predicated region
      $region21: #{tpu_custom_call.1} parent=5 // pred_check
        %p133 = pneg %p132
      $region22: #{tpu_custom_call.1} parent=5 // pred_check_branch
        %135 = sbr.rel (%p133) target = $region24
      $region23: #{tpu_custom_call.1} parent=5 // pred_region
        _
      $region24: #{tpu_custom_call.1} parent=5 // pred_fallthru
        _
      %p136 = scmp.le.s32.totalorder 1, %s11
      %p137 = scmp.lt.s32.totalorder %s11, 3
      %p138 = pnand %p136, %p137
      %p139 = pneg %p138
      // Predicated region
      $region25: #{tpu_custom_call.1} parent=5 // pred_check
        _
      $region26: #{tpu_custom_call.1} parent=5 // pred_check_branch
        %141 = sbr.rel (%p138) target = $region28
      $region27: #{tpu_custom_call.1} parent=5 // pred_region
        %s142 = ssub.s32 %s11, 1
        // Predicated region
        $region29: #{tpu_custom_call.1} parent=27 // pred_check
          %p143 = pneg %p49
        $region30: #{tpu_custom_call.1} parent=27 // pred_check_branch
          %145 = sbr.rel (%p143) target = $region32
        $region31: #{tpu_custom_call.1} parent=27 // pred_region
          %146 = dma.done [#allocation4], 128
        $region32: #{tpu_custom_call.1} parent=27 // pred_fallthru
          _
        // Predicated region
        $region33: #{tpu_custom_call.1} parent=27 // pred_check
          %p147 = pneg %p70
        $region34: #{tpu_custom_call.1} parent=27 // pred_check_branch
          %149 = sbr.rel (%p147) target = $region36
        $region35: #{tpu_custom_call.1} parent=27 // pred_region
          %150 = dma.done [#allocation7], 512
        $region36: #{tpu_custom_call.1} parent=27 // pred_fallthru
          _
        %p151 = pneg %p49
        %p152 = pneg %p46
        %p153 = pneg %p70
        %p154 = pneg %p67
        %p155 = pneg %p91
        %p156 = pneg %p88
        %p157 = scmp.eq.s32.totalorder %s20, 0
        // Predicated region
        $region37: #{tpu_custom_call.1} parent=27 // pred_check
          %p158 = pneg %p157
        $region38: #{tpu_custom_call.1} parent=27 // pred_check_branch
          %160 = sbr.rel (%p158) target = $region40
        $region39: #{tpu_custom_call.1} parent=27 // pred_region
          %p161 = scmp.eq.s32.totalorder %s21, 0
          // Predicated region
          $region41: #{tpu_custom_call.1} parent=39 // pred_check
            %p162 = pneg %p161
          $region42: #{tpu_custom_call.1} parent=39 // pred_check_branch
            %164 = sbr.rel (%p162) target = $region44
          $region43: #{tpu_custom_call.1} parent=39 // pred_region
            %vm165 = vcmask 253952
            %166 = vst.msk [vmem:[#allocation2] sm:$0x1] %vm165, 0.0
          $region44: #{tpu_custom_call.1} parent=39 // pred_fallthru
            _
          %v167 = vld [vmem:[#allocation3] sm:$0xff]
          %v168 = vld [vmem:[#allocation2] sm:$0x1]
          %vm169 = vcmask 261120
          %v170 = vsel %vm169, %v167, 0.0
          %v171 = vrot.slane %v170, 4
          %v172 = vadd.f32 %v170, %v171
          %v173 = vrot.slane %v172, 2
          %v174 = vadd.f32 %v172, %v173
          %v175 = vrot.slane %v174, 1
          %v176 = vadd.f32 %v174, %v175
          %v177 = vadd.f32 %v168, %v176
          %vm178 = vcmask 253952
          %179 = vst.msk [vmem:[#allocation2] sm:$0x1] %vm178, %v177
          // Predicated region
          $region45: #{tpu_custom_call.1} parent=39 // pred_check
            %p180 = pneg %p161
          $region46: #{tpu_custom_call.1} parent=39 // pred_check_branch
            %182 = sbr.rel (%p180) target = $region48
          $region47: #{tpu_custom_call.1} parent=39 // pred_region
            %v183 = vld [vmem:[#allocation2] sm:$0x1]
            %v184 = vmul.f32 %v183, 0.125
            %v185 = vld [vmem:[#allocation6] sm:$0xff]
            %v186 = vld [vmem:[#allocation6 + $0x8] sm:$0xff]
            %v187 = vld [vmem:[#allocation6 + $0x10] sm:$0xff]
            %v188 = vld [vmem:[#allocation6 + $0x18] sm:$0xff]
            %v190 = vsel %vm169, %v184, 0
            %192 = vmatprep.subr.mxu0 0.0
            %193 = vmatpush1.msra.mxu0 0.0
            %194 = vmatprep.subr.mxu0 0.0
            %195 = vmatpush1.msra.mxu0 0.0
            %196 = vmatprep.subr.mxu0 0.0
            %197 = vmatpush1.msra.mxu0 0.0
            %198 = vmatprep.subr.mxu0 0.0
            %199 = vmatpush1.msra.mxu0 0.0
            %200 = vmatprep.subr.mxu0 0.0
            %201 = vmatpush1.msra.mxu0 0.0
            %202 = vmatprep.subr.mxu0 0.0
            %203 = vmatpush1.msra.mxu0 0.0
            %204 = vmatprep.subr.mxu0 0.0
            %205 = vmatpush1.msra.mxu0 0.0
            %206 = vmatprep.subr.mxu0 0.0
            %207 = vmatpush1.msra.mxu0 0.0
            %208 = vmatprep.subr.mxu0 0.0
            %209 = vmatpush1.msra.mxu0 0.0
            %210 = vmatprep.subr.mxu0 0.0
            %211 = vmatpush1.msra.mxu0 0.0
            %212 = vmatprep.subr.mxu0 0.0
            %213 = vmatpush1.msra.mxu0 0.0
            %214 = vmatprep.subr.mxu0 0.0
            %215 = vmatpush1.msra.mxu0 0.0
            %216 = vmatprep.subr.mxu0 0.0
            %217 = vmatpush1.msra.mxu0 %v188
            %218 = vmatprep.subr.mxu0 0.0
            %219 = vmatpush1.msra.mxu0 %v187
            %220 = vmatprep.subr.mxu0 0.0
            %221 = vmatpush1.msra.mxu0 %v186
            %222 = vmatprep.subr.mxu0 0.0
            %223 = vmatpush1.msra.mxu0 %v185
            %224 = vmatprep.subr.mxu0 0.0
            %225 = vmatpush2.msra.mxu0 0.0
            %226 = vmatprep.subr.mxu0 0.0
            %227 = vmatpush2.msra.mxu0 0.0
            %228 = vmatprep.subr.mxu0 0.0
            %229 = vmatpush2.msra.mxu0 0.0
            %230 = vmatprep.subr.mxu0 0.0
            %231 = vmatpush2.msra.mxu0 0.0
            %232 = vmatprep.subr.mxu0 0.0
            %233 = vmatpush2.msra.mxu0 0.0
            %234 = vmatprep.subr.mxu0 0.0
            %235 = vmatpush2.msra.mxu0 0.0
            %236 = vmatprep.subr.mxu0 0.0
            %237 = vmatpush2.msra.mxu0 0.0
            %238 = vmatprep.subr.mxu0 0.0
            %239 = vmatpush2.msra.mxu0 0.0
            %240 = vmatprep.subr.mxu0 0.0
            %241 = vmatpush2.msra.mxu0 0.0
            %242 = vmatprep.subr.mxu0 0.0
            %243 = vmatpush2.msra.mxu0 0.0
            %244 = vmatprep.subr.mxu0 0.0
            %245 = vmatpush2.msra.mxu0 0.0
            %246 = vmatprep.subr.mxu0 0.0
            %247 = vmatpush2.msra.mxu0 0.0
            %248 = vmatprep.subr.mxu0 0.0
            %249 = vmatpush2.msra.mxu0 0.0
            %250 = vmatprep.subr.mxu0 0.0
            %251 = vmatpush2.msra.mxu0 0.0
            %252 = vmatprep.subr.mxu0 0.0
            %253 = vmatpush2.msra.mxu0 0.0
            %254 = vmatprep.subr.mxu0 0.0
            %255 = vmatpush2.msra.mxu0 0.0
            %256 = vmatprep.mubr.f32.mxu0 0.0
            %257 = vmatmul.mubr.f32.gmra.mxu0 %v190
            %v258 = vpop.f32.mrf.mxu0
            %v259 = vadd.f32 0.0, %v258
            %v260 = vpop.f32.mrf.mxu0
            %261 = vdwg.mxu0
            %v262 = vtanh.pop %v259
            %263 = vst.msk [vmem:[#allocation2] sm:$0x1] %vm178, %v262
          $region48: #{tpu_custom_call.1} parent=39 // pred_fallthru
            _
        $region40: #{tpu_custom_call.1} parent=27 // pred_fallthru
          _
        %p264 = scmp.eq.s32.totalorder %s20, 1
        // Predicated region
        $region49: #{tpu_custom_call.1} parent=27 // pred_check
          %p265 = pneg %p264
        $region50: #{tpu_custom_call.1} parent=27 // pred_check_branch
          %267 = sbr.rel (%p265) target = $region52
        $region51: #{tpu_custom_call.1} parent=27 // pred_region
          %p268 = scmp.eq.s32.totalorder %s21, 0
          // Predicated region
          $region53: #{tpu_custom_call.1} parent=51 // pred_check
            %p269 = pneg %p268
          $region54: #{tpu_custom_call.1} parent=51 // pred_check_branch
            %271 = sbr.rel (%p269) target = $region56
          $region55: #{tpu_custom_call.1} parent=51 // pred_region
            %vm272 = vcmask 253952
            %273 = vst.msk [vmem:[#allocation8] sm:$0x1] %vm272, 0.0
          $region56: #{tpu_custom_call.1} parent=51 // pred_fallthru
            _
          %v274 = vld [vmem:[#allocation3] sm:$0xff]
          %v275 = vld [vmem:[#allocation2] sm:$0x1]
          %v277 = vlaneseq
          %v278 = vshrl.u32 %v277, 7
          %v279 = vsub.s32 0, %v278
          %v280 = vrot.slane %v275, %v279
          %v282 = vmul.f32 %v274, %v280
          %vm283 = vcmask 261120
          %v284 = vsel %vm283, %v282, 0.0
          %285 = vadd.xlane.f32.xlu0 %v284
          %v286 = vpop.xlane.xlu0 %285
          %v287 = vxor.u32 %v286, 2147483648
          %v288 = vmul.f32 %v287, 1.442695
          %v289 = vpow.pop %v288
          %v290 = vadd.f32 %v289, 1.0
          %v291 = vrcp.pop %v290
          %v292 = vmul.f32 1.0, %v291
          %v293 = vld [vmem:[#allocation8] sm:$0x1]
          %v294 = vmul.f32 %v274, %v292
          %v295 = vsel %vm283, %v294, 0.0
          %v296 = vrot.slane %v295, 4
          %v297 = vadd.f32 %v295, %v296
          %v298 = vrot.slane %v297, 2
          %v299 = vadd.f32 %v297, %v298
          %v300 = vrot.slane %v299, 1
          %v301 = vadd.f32 %v299, %v300
          %v302 = vadd.f32 %v293, %v301
          %vm303 = vcmask 253952
          %304 = vst.msk [vmem:[#allocation8] sm:$0x1] %vm303, %v302
        $region52: #{tpu_custom_call.1} parent=27 // pred_fallthru
          _
        // Predicated region
        $region57: #{tpu_custom_call.1} parent=27 // pred_check
          %p305 = pneg %p88
        $region58: #{tpu_custom_call.1} parent=27 // pred_check_branch
          %307 = sbr.rel (%p305) target = $region60
        $region59: #{tpu_custom_call.1} parent=27 // pred_region
          %s309 = ssub.s32 16, 16
          %310 = vsyncadd [#allocation5], %s309
          %s312 = sshll.u32 [#allocation8], 4
          %s313 = int_to_ptr.vmem [resolvable:$true] %s312
          %315 = dma.vmem_to_hbm [thread:$0]  %s313, 16, %s2, [#allocation5]
        $region60: #{tpu_custom_call.1} parent=27 // pred_fallthru
          _
        // Predicated region
        $region61: #{tpu_custom_call.1} parent=27 // pred_check
          %p316 = pneg %p88
        $region62: #{tpu_custom_call.1} parent=27 // pred_check_branch
          %318 = sbr.rel (%p316) target = $region64
        $region63: #{tpu_custom_call.1} parent=27 // pred_region
          %319 = dma.done [#allocation5], 16
        $region64: #{tpu_custom_call.1} parent=27 // pred_fallthru
          _
      $region28: #{tpu_custom_call.1} parent=5 // pred_fallthru
        _
      %p320 = scmp.le.s32.totalorder 2, %s11
      // Predicated region
      $region65: #{tpu_custom_call.1} parent=5 // pred_check
        %p321 = pneg %p320
      $region66: #{tpu_custom_call.1} parent=5 // pred_check_branch
        %323 = sbr.rel (%p321) target = $region68
      $region67: #{tpu_custom_call.1} parent=5 // pred_region
        %s324 = ssub.s32 %s11, 2
      $region68: #{tpu_custom_call.1} parent=5 // pred_fallthru
        _
    $region6: #{tpu_custom_call.1} parent=1 // loop_footer
      %s15 = sadd.s32 1, %s11
    $region7: #{tpu_custom_call.1} parent=1 // loop_footer_branch
      %10 = sbr.rel target = $region3
    $region8: #{tpu_custom_call.1} parent=1 // loop_exit
      _
    %325 = vsyncpa [#allocation4], 1
    %s326 = scalar_lea.sflag [#allocation4], 1
    %327 = vsyncpa %s326, 1
    %328 = vsyncpa [#allocation7], 1
    %329 = vsyncpa [#allocation5], 1
    %s330 = scalar_lea.sflag [#allocation5], 1
    %331 = vsyncpa %s330, 1

</llo_original>
